<compile_context>
chip_gen: v7x
topology: tpu7x:2x2x1
jax: 0.10.0
libtpu: 0.0.40
codegen_flags: <defaults>
</compile_context>

<pallas_src>
import functools

import jax
import jax.numpy as jnp
from jax.experimental import pallas as pl
from jax.experimental.pallas import tpu as pltpu


# ---------------------------------------------------------------------------
# forward: pure pass-through (no compute in the PyTorch module)
# ---------------------------------------------------------------------------
def contact_head_forward(contacts):
    """ContactHead.forward -> dict(logits=representations['mlm']['contacts'])."""
    # No Pallas kernel: a copy would be 2*B*N*N HBM traffic for zero compute.
    return dict(logits=contacts)


# ---------------------------------------------------------------------------
# loss kernel: row-tiled over the (N x N) plane, numerator only
# ---------------------------------------------------------------------------
def _contact_loss_kernel(pos_r_ref, pos_c_ref, mask_r_ref, mask_c_ref,
                         logits_ref, num_out_ref, num_acc, *,
                         cutoff_sq, diagonal, tm, tiles_per_split,
                         use_mxu_gram):
    s = pl.program_id(0)                 # row-range split (v7x 2-TC balance)
    i = pl.program_id(2)                 # row tile within this split
    n_i = pl.num_programs(2)

    @pl.when(i == 0)
    def _():
        num_acc[...] = jnp.zeros_like(num_acc)

    row0 = pl.multiple_of((s * tiles_per_split + i) * tm, 8)
    pos_r = pos_r_ref[0, pl.ds(row0, tm), :]         # (tm, 3) f32, this tile's rows
    pos_c = pos_c_ref[0]                             # (3, N)  f32, all cols (resident)
    m_r = mask_r_ref[0, pl.ds(row0, tm), :] > 0.5    # (tm, 1) bool
    m_c = mask_c_ref[0] > 0.5                        # (1, N)  bool
    p = logits_ref[0].astype(jnp.float32)            # (tm, N) contact probabilities
    n = p.shape[1]

    # Squared pairwise distances.
    if use_mxu_gram:
        # Offload the gram onto the otherwise-idle MXU (K=3, HIGHEST precision).
        # Reintroduces a^2+b^2-2ab cancellation -> not bit-exact with reference.
        r2 = jnp.sum(pos_r * pos_r, axis=1, keepdims=True)   # (tm, 1)
        c2 = jnp.sum(pos_c * pos_c, axis=0, keepdims=True)   # (1, N)
        gram = jnp.dot(pos_r, pos_c,
                       preferred_element_type=jnp.float32,
                       precision=jax.lax.Precision.HIGHEST)  # (tm, N)
        d2 = (r2 + c2) - 2.0 * gram
    else:
        # Pure-VPU broadcast differences; numerically matches the reference.
        d2 = ((pos_r[:, 0:1] - pos_c[0:1, :]) ** 2
              + (pos_r[:, 1:2] - pos_c[1:2, :]) ** 2
              + (pos_r[:, 2:3] - pos_c[2:3, :]) ** 2)
    targets = d2 <= cutoff_sq                                 # bool, no sqrt

    # BCE with binary targets: only one of log(p)/log(1-p) matters per element.
    # torch BCE clamps each log term at -100.  Negation is folded into the
    # finalize (num_out = -sum), saving one VPU op per element here.
    s_val = jnp.maximum(jnp.log(jnp.where(targets, p, 1.0 - p)), -100.0)

    # Band mask from low-rank iotas: (tm,1) row ids vs (1,N) shifted col ids.
    row_ids = jax.lax.broadcasted_iota(jnp.int32, (tm, 1), 0)
    col_off = jax.lax.broadcasted_iota(jnp.int32, (1, n), 1) - row0
    if diagonal == 1:
        band = row_ids != col_off          # fast path: drop abs + compare
    else:
        band = jnp.abs(row_ids - col_off) >= diagonal
    keep = band & m_r & m_c
    # TODO(synk): optional 'coord_plddt' weighting branch not implemented
    # (square_weight == 1.0, as in the synthetic batch).

    # Reduce only over the row (sublane) axis per step; keep lanes wide.
    num_acc[...] += jnp.sum(jnp.where(keep, s_val, 0.0), axis=0, keepdims=True)

    # Finalize once per (split, batch): single cross-lane reduce + writeback.
    @pl.when(i == n_i - 1)
    def _():
        num_out_ref[...] = jnp.full(num_out_ref.shape,
                                    -jnp.sum(num_acc[...]), jnp.float32)


# ---------------------------------------------------------------------------
# tiling helpers
# ---------------------------------------------------------------------------
def _round_up(x, m):
    return (x + m - 1) // m * m


def _choose_tiling(n, itemsize, target=1024, dbuf_budget=16 << 20):
    """Return (n_pad, tm): tm | n_pad, tm % 8 == 0, logits double-buffer <= budget."""
    n_pad = _round_up(max(n, 8), 8)
    cap = dbuf_budget // (2 * n_pad * itemsize)        # rows per double-buffered tile
    cap = max(8, min(cap, target, n_pad))
    cap = (cap // 8) * 8
    best = 8
    for tm in range(cap, 7, -8):                       # prefer exact divisor (no pad)
        if n_pad % tm == 0:
            best = tm
            break
    if best == n_pad or best >= cap // 2:
        return n_pad, best
    # Divisors are all tiny: pad the rows/cols up instead of shrinking the tile.
    return _round_up(n_pad, cap), cap


# ---------------------------------------------------------------------------
# loss wrapper
# ---------------------------------------------------------------------------
def contact_head_loss(logits, pseudo_beta, pseudo_beta_mask, *,
                      cutoff=8.0, diagonal=1, loss_min=None, loss_max=None,
                      tm=None, use_mxu_gram=False):
    """ContactHead.loss — masked-mean BCE between contact probs and d<=cutoff."""
    if diagonal < 1:
        # TODO(synk): diagonal == 0 double-counts the main diagonal in the
        # PyTorch triu+tril formulation; not supported here.
        raise ValueError("diagonal must be >= 1")

    B, N, N2 = logits.shape
    assert N == N2 and pseudo_beta.shape == (B, N, 3)

    if tm is None:
        n_pad, tm = _choose_tiling(N, jnp.dtype(logits.dtype).itemsize)
    else:
        assert tm % 8 == 0, tm
        n_pad = _round_up(max(N, tm), tm)

    # Binary mask used consistently by both the kernel (>0.5) and the wrapper.
    mask_bin = (pseudo_beta_mask > 0.5).astype(jnp.float32)          # (B, N)

    # Denominator moved out of the kernel: it only depends on the mask & band.
    #   den = (sum m)^2 - sum_{|i-j| < diagonal} m_i m_j    (O(N * diagonal))
    s_m = jnp.sum(mask_bin, axis=-1)
    excl = jnp.sum(mask_bin * mask_bin, axis=-1)
    for k in range(1, diagonal):
        excl = excl + 2.0 * jnp.sum(mask_bin[:, :-k] * mask_bin[:, k:], axis=-1)
    total_den = jnp.sum(s_m * s_m - excl)

    # Pad rows/cols so tm | n_pad; padded residues have mask 0 (drop out of num).
    pos = pseudo_beta.astype(jnp.float32)
    if n_pad != N:
        pad = n_pad - N
        logits = jnp.pad(logits, ((0, 0), (0, pad), (0, pad)),
                         constant_values=0.5)        # finite log, masked anyway
        pos = jnp.pad(pos, ((0, 0), (0, pad), (0, 0)))
        mask_bin = jnp.pad(mask_bin, ((0, 0), (0, pad)))

    pos_rows = pos                                    # (B, n_pad, 3) resident per b
    pos_cols = jnp.swapaxes(pos, 1, 2)                # (B, 3, n_pad) resident per b
    mask_rows = mask_bin.reshape(B, n_pad, 1)
    mask_cols = mask_bin.reshape(B, 1, n_pad)
    # logits stay in their native dtype (e.g. bf16) — cast to f32 inside VMEM.

    n_tiles = n_pad // tm
    n_splits = 2 if (n_tiles % 2 == 0 and n_tiles >= 2) else 1   # v7x: 2 TCs busy
    tiles_per_split = n_tiles // n_splits

    kernel = functools.partial(
        _contact_loss_kernel,
        cutoff_sq=float(cutoff) * float(cutoff), diagonal=int(diagonal),
        tm=tm, tiles_per_split=tiles_per_split, use_mxu_gram=use_mxu_gram)

    num = pl.pallas_call(
        kernel,
        out_shape=jax.ShapeDtypeStruct((n_splits, B, 8, 128), jnp.float32),
        grid=(n_splits, B, tiles_per_split),
        in_specs=[
            pl.BlockSpec((1, n_pad, 3), lambda s, b, i: (b, 0, 0)),  # row positions (resident)
            pl.BlockSpec((1, 3, n_pad), lambda s, b, i: (b, 0, 0)),  # col positions (resident)
            pl.BlockSpec((1, n_pad, 1), lambda s, b, i: (b, 0, 0)),  # row mask (resident)
            pl.BlockSpec((1, 1, n_pad), lambda s, b, i: (b, 0, 0)),  # col mask (resident)
            pl.BlockSpec((1, tm, n_pad),                             # logits row tile
                         lambda s, b, i: (b, s * tiles_per_split + i, 0)),
        ],
        out_specs=pl.BlockSpec((1, 1, 8, 128), lambda s, b, i: (s, b, 0, 0)),
        scratch_shapes=[pltpu.VMEM((1, n_pad), jnp.float32)],        # num accumulator
        compiler_params=pltpu.CompilerParams(
            dimension_semantics=("parallel", "parallel", "arbitrary"),
            vmem_limit_bytes=32 * 1024 * 1024),
    )(pos_rows, pos_cols, mask_rows, mask_cols, logits)

    total_num = jnp.sum(num[:, :, 0, 0])
    avg_error = total_num / (total_den + 1e-6)        # functional.masked_mean
    if loss_min is not None or loss_max is not None:
        avg_error = jnp.clip(avg_error, loss_min, loss_max)
    return dict(loss=avg_error)


# ---------------------------------------------------------------------------
# pure-JAX reference (correctness spot-check)
# ---------------------------------------------------------------------------
def _reference_loss(logits, positions, mask, cutoff=8.0, diagonal=1):
    logits = logits.astype(jnp.float32)
    d2 = jnp.sum((positions[:, :, None, :] - positions[:, None, :, :]) ** 2, -1)
    targets = (d2 <= cutoff * cutoff).astype(jnp.float32)
    log_p = jnp.maximum(jnp.log(logits), -100.0)
    log_1mp = jnp.maximum(jnp.log(1.0 - logits), -100.0)
    errors = -(targets * log_p + (1.0 - targets) * log_1mp)
    sq_mask = mask[:, :, None] * mask[:, None, :]
    i = jnp.arange(logits.shape[1])
    band = (jnp.abs(i[:, None] - i[None, :]) >= diagonal).astype(jnp.float32)
    sq_mask = sq_mask * band
    return jnp.sum(errors * sq_mask) / (jnp.sum(sq_mask) + 1e-6)


if __name__ == "__main__":
    key = jax.random.PRNGKey(0)
    B, N = 2, 16
    k1, k2, k3 = jax.random.split(key, 3)

    # Synthetic "representations['mlm']['contacts']": probabilities in (0, 1).
    contacts = jax.nn.sigmoid(jax.random.normal(k1, (B, N, N), jnp.float32))
    # Synthetic batch: pseudo-beta coordinates (Angstrom-ish scale) + mask.
    positions = 6.0 * jax.random.normal(k2, (B, N, 3), jnp.float32)
    mask = (jax.random.uniform(k3, (B, N)) > 0.2).astype(jnp.float32)

    # forward pass: pure pass-through (no kernel, no HBM traffic)
    fwd = contact_head_forward(contacts)
    logits = jax.block_until_ready(fwd["logits"])
    assert jnp.allclose(logits, contacts), "forward pass-through mismatch"

    ref = _reference_loss(logits, positions, mask, cutoff=8.0, diagonal=1)

    # 1) multi-tile path: tm=8 -> 2 row tiles -> exercises the 2-way split axis
    out = contact_head_loss(logits, positions, mask, cutoff=8.0, diagonal=1, tm=8)
    loss = jax.block_until_ready(out["loss"])
    assert jnp.allclose(loss, ref, rtol=1e-5, atol=1e-5), (loss, ref)

    # 2) wider band (diagonal=2) -> exercises the wrapper denominator formula
    ref_d2 = _reference_loss(logits, positions, mask, cutoff=8.0, diagonal=2)
    out_d2 = contact_head_loss(logits, positions, mask,
                               cutoff=8.0, diagonal=2, tm=8)
    loss_d2 = jax.block_until_ready(out_d2["loss"])
    assert jnp.allclose(loss_d2, ref_d2, rtol=1e-5, atol=1e-5), (loss_d2, ref_d2)

    # 3) auto tiling + row/col padding path (N=20 pads to 24 inside the wrapper)
    Np = 20
    contacts_p = jax.nn.sigmoid(jax.random.normal(k1, (B, Np, Np), jnp.float32))
    positions_p = 6.0 * jax.random.normal(k2, (B, Np, 3), jnp.float32)
    mask_p = (jax.random.uniform(k3, (B, Np)) > 0.2).astype(jnp.float32)
    ref_p = _reference_loss(contacts_p, positions_p, mask_p, cutoff=8.0, diagonal=1)
    out_p = contact_head_loss(contacts_p, positions_p, mask_p,
                              cutoff=8.0, diagonal=1)
    loss_p = jax.block_until_ready(out_p["loss"])
    assert jnp.allclose(loss_p, ref_p, rtol=1e-5, atol=1e-5), (loss_p, ref_p)

    # 4) optional MXU-gram distances (a^2+b^2-2ab): looser tolerance (cancellation)
    out_m = contact_head_loss(logits, positions, mask, cutoff=8.0, diagonal=1,
                              tm=8, use_mxu_gram=True)
    loss_m = jax.block_until_ready(out_m["loss"])
    assert jnp.allclose(loss_m, ref, rtol=1e-3, atol=1e-3), (loss_m, ref)

    print("KERNEL_OK")
</pallas_src>

<mosaic_0001>
module attributes {stable_mosaic.version = 11 : i64} {
  func.func @_contact_loss_kernel(%arg0: i32, %arg1: i32, %arg2: i32, %arg3: memref<1x16x3xf32, #tpu.memory_space<vmem>>, %arg4: memref<1x3x16xf32, #tpu.memory_space<vmem>>, %arg5: memref<1x16x1xf32, #tpu.memory_space<vmem>>, %arg6: memref<1x1x16xf32, #tpu.memory_space<vmem>>, %arg7: memref<1x8x16xf32, #tpu.memory_space<vmem>>, %arg8: memref<1x1x8x128xf32, #tpu.memory_space<vmem>>, %arg9: memref<1x16xf32, #tpu.memory_space<vmem>>) attributes {dimension_semantics = [#tpu.dimension_semantics<parallel>, #tpu.dimension_semantics<parallel>, #tpu.dimension_semantics<arbitrary>], iteration_bounds = array<i64: 2, 2, 1>, scalar_prefetch = 0 : i64, scratch_operands = 1 : i64, tpu.core_type = #tpu.core_type<tc>, window_params = [{transform_indices = @transform_0, window_bounds = array<i64: 1, 16, 3>}, {transform_indices = @transform_1, window_bounds = array<i64: 1, 3, 16>}, {transform_indices = @transform_2, window_bounds = array<i64: 1, 16, 1>}, {transform_indices = @transform_3, window_bounds = array<i64: 1, 1, 16>}, {transform_indices = @transform_4, window_bounds = array<i64: 1, 8, 16>}, {transform_indices = @transform_5, window_bounds = array<i64: 1, 1, 8, 128>}]} {
    %c0_i32 = arith.constant 0 : i32
    %0 = arith.cmpi eq, %arg2, %c0_i32 : i32
    %1 = arith.extui %0 : i1 to i32
    %c0_i32_0 = arith.constant 0 : i32
    %2 = arith.cmpi ne, %1, %c0_i32_0 : i32
    scf.if %2 {
      %cst_25 = arith.constant 0.000000e+00 : f32
      %72 = vector.broadcast %cst_25 : f32 to vector<1x16xf32>
      %c0_26 = arith.constant 0 : index
      %c0_27 = arith.constant 0 : index
      %73 = vector.load %arg9[%c0_26, %c0_27] : memref<1x16xf32, #tpu.memory_space<vmem>>, vector<1x16xf32>
      tpu.vector_store %arg9[%c0_26, %c0_27], %72 {strides = array<i32>} : memref<1x16xf32, #tpu.memory_space<vmem>>, vector<1x16xf32>,
    } else {
    }
    %c1_i32 = arith.constant 1 : i32
    %3 = arith.muli %arg0, %c1_i32 : i32
    %4 = arith.addi %3, %arg2 : i32
    %c8_i32 = arith.constant 8 : i32
    %5 = arith.muli %4, %c8_i32 : i32
    %6 = tpu.assume_multiple %5, 8 : i32
    %c0 = arith.constant 0 : index
    %7 = arith.index_cast %6 : i32 to index
    %c0_1 = arith.constant 0 : index
    %8 = vector.load %arg3[%c0, %7, %c0_1] : memref<1x16x3xf32, #tpu.memory_space<vmem>>, vector<1x8x3xf32>
    %9 = vector.shape_cast %8 : vector<1x8x3xf32> to vector<8x3xf32>
    %c0_2 = arith.constant 0 : index
    %c0_3 = arith.constant 0 : index
    %c0_4 = arith.constant 0 : index
    %10 = vector.load %arg4[%c0_2, %c0_3, %c0_4] : memref<1x3x16xf32, #tpu.memory_space<vmem>>, vector<1x3x16xf32>
    %11 = vector.shape_cast %10 : vector<1x3x16xf32> to vector<3x16xf32>
    %c0_5 = arith.constant 0 : index
    %12 = arith.index_cast %6 : i32 to index
    %c0_6 = arith.constant 0 : index
    %13 = vector.load %arg5[%c0_5, %12, %c0_6] : memref<1x16x1xf32, #tpu.memory_space<vmem>>, vector<1x8x1xf32>
    %14 = vector.shape_cast %13 : vector<1x8x1xf32> to vector<8x1xf32>
    %cst = arith.constant 5.000000e-01 : f32
    %15 = vector.broadcast %cst : f32 to vector<8x1xf32>
    %16 = arith.cmpf ogt, %14, %15 : vector<8x1xf32>
    %c0_7 = arith.constant 0 : index
    %c0_8 = arith.constant 0 : index
    %c0_9 = arith.constant 0 : index
    %17 = vector.load %arg6[%c0_7, %c0_8, %c0_9] : memref<1x1x16xf32, #tpu.memory_space<vmem>>, vector<1x1x16xf32>
    %18 = vector.shape_cast %17 : vector<1x1x16xf32> to vector<1x16xf32>
    %cst_10 = arith.constant 5.000000e-01 : f32
    %19 = vector.broadcast %cst_10 : f32 to vector<1x16xf32>
    %20 = arith.cmpf ogt, %18, %19 : vector<1x16xf32>
    %c0_11 = arith.constant 0 : index
    %c0_12 = arith.constant 0 : index
    %c0_13 = arith.constant 0 : index
    %21 = vector.load %arg7[%c0_11, %c0_12, %c0_13] : memref<1x8x16xf32, #tpu.memory_space<vmem>>, vector<1x8x16xf32>
    %22 = vector.shape_cast %21 : vector<1x8x16xf32> to vector<8x16xf32>
    %23 = vector.extract_strided_slice %9 {offsets = [0, 0], sizes = [8, 1], strides = [1, 1]} : vector<8x3xf32> to vector<8x1xf32>
    %24 = vector.extract_strided_slice %11 {offsets = [0, 0], sizes = [1, 16], strides = [1, 1]} : vector<3x16xf32> to vector<1x16xf32>
    %25 = vector.broadcast %23 : vector<8x1xf32> to vector<8x16xf32>
    %26 = vector.broadcast %24 : vector<1x16xf32> to vector<8x16xf32>
    %27 = arith.subf %25, %26 : vector<8x16xf32>
    %28 = arith.mulf %27, %27 : vector<8x16xf32>
    %29 = vector.extract_strided_slice %9 {offsets = [0, 1], sizes = [8, 1], strides = [1, 1]} : vector<8x3xf32> to vector<8x1xf32>
    %30 = vector.extract_strided_slice %11 {offsets = [1, 0], sizes = [1, 16], strides = [1, 1]} : vector<3x16xf32> to vector<1x16xf32>
    %31 = vector.broadcast %29 : vector<8x1xf32> to vector<8x16xf32>
    %32 = vector.broadcast %30 : vector<1x16xf32> to vector<8x16xf32>
    %33 = arith.subf %31, %32 : vector<8x16xf32>
    %34 = arith.mulf %33, %33 : vector<8x16xf32>
    %35 = arith.addf %28, %34 : vector<8x16xf32>
    %36 = vector.extract_strided_slice %9 {offsets = [0, 2], sizes = [8, 1], strides = [1, 1]} : vector<8x3xf32> to vector<8x1xf32>
    %37 = vector.extract_strided_slice %11 {offsets = [2, 0], sizes = [1, 16], strides = [1, 1]} : vector<3x16xf32> to vector<1x16xf32>
    %38 = vector.broadcast %36 : vector<8x1xf32> to vector<8x16xf32>
    %39 = vector.broadcast %37 : vector<1x16xf32> to vector<8x16xf32>
    %40 = arith.subf %38, %39 : vector<8x16xf32>
    %41 = arith.mulf %40, %40 : vector<8x16xf32>
    %42 = arith.addf %35, %41 : vector<8x16xf32>
    %cst_14 = arith.constant 6.400000e+01 : f32
    %43 = vector.broadcast %cst_14 : f32 to vector<8x16xf32>
    %44 = arith.cmpf ole, %42, %43 : vector<8x16xf32>
    %cst_15 = arith.constant 1.000000e+00 : f32
    %45 = vector.broadcast %cst_15 : f32 to vector<8x16xf32>
    %46 = arith.subf %45, %22 : vector<8x16xf32>
    %47 = arith.select %44, %22, %46 : vector<8x16xi1>, vector<8x16xf32>
    %48 = math.log %47 : vector<8x16xf32>
    %cst_16 = arith.constant -1.000000e+02 : f32
    %49 = vector.broadcast %cst_16 : f32 to vector<8x16xf32>
    %50 = arith.maximumf %48, %49 : vector<8x16xf32>
    %51 = tpu.iota {dimensions = array<i32: 0>} : vector<8x1xi32>
    %52 = tpu.iota {dimensions = array<i32: 1>} : vector<1x16xi32>
    %53 = vector.broadcast %6 : i32 to vector<1x16xi32>
    %54 = arith.subi %52, %53 : vector<1x16xi32>
    %55 = vector.broadcast %51 : vector<8x1xi32> to vector<8x16xi32>
    %56 = vector.broadcast %54 : vector<1x16xi32> to vector<8x16xi32>
    %57 = arith.cmpi ne, %55, %56 : vector<8x16xi32>
    %58 = vector.broadcast %16 : vector<8x1xi1> to vector<8x16xi1>
    %59 = arith.andi %57, %58 : vector<8x16xi1>
    %60 = vector.broadcast %20 : vector<1x16xi1> to vector<8x16xi1>
    %61 = arith.andi %59, %60 : vector<8x16xi1>
    %c0_17 = arith.constant 0 : index
    %c0_18 = arith.constant 0 : index
    %62 = vector.load %arg9[%c0_17, %c0_18] : memref<1x16xf32, #tpu.memory_space<vmem>>, vector<1x16xf32>
    %cst_19 = arith.constant 0.000000e+00 : f32
    %63 = vector.broadcast %cst_19 : f32 to vector<8x16xf32>
    %64 = arith.select %61, %50, %63 : vector<8x16xi1>, vector<8x16xf32>
    %cst_20 = arith.constant dense<0.000000e+00> : vector<16xf32>
    %65 = vector.multi_reduction <add>, %64, %cst_20 [0] : vector<8x16xf32> to vector<16xf32>
    %66 = vector.shape_cast %65 : vector<16xf32> to vector<1x16xf32>
    %67 = arith.addf %62, %66 : vector<1x16xf32>
    %c0_21 = arith.constant 0 : index
    %c0_22 = arith.constant 0 : index
    %68 = vector.load %arg9[%c0_21, %c0_22] : memref<1x16xf32, #tpu.memory_space<vmem>>, vector<1x16xf32>
    tpu.vector_store %arg9[%c0_21, %c0_22], %67 {strides = array<i32>} : memref<1x16xf32, #tpu.memory_space<vmem>>, vector<1x16xf32>,
    %c0_i32_23 = arith.constant 0 : i32
    %69 = arith.cmpi eq, %arg2, %c0_i32_23 : i32
    %70 = arith.extui %69 : i1 to i32
    %c0_i32_24 = arith.constant 0 : i32
    %71 = arith.cmpi ne, %70, %c0_i32_24 : i32
    scf.if %71 {
      %c0_25 = arith.constant 0 : index
      %c0_26 = arith.constant 0 : index
      %72 = vector.load %arg9[%c0_25, %c0_26] : memref<1x16xf32, #tpu.memory_space<vmem>>, vector<1x16xf32>
      %73 = vector.shape_cast %72 : vector<1x16xf32> to vector<1x1x16xf32>
      %cst_27 = arith.constant dense<0.000000e+00> : vector<1xf32>
      %74 = vector.multi_reduction <add>, %73, %cst_27 [1, 2] : vector<1x1x16xf32> to vector<1xf32>
      %75 = vector.shape_cast %74 : vector<1xf32> to vector<1x1x1xf32>
      %76 = vector.extract %75[0, 0, 0] : f32 from vector<1x1x1xf32>
      %cst_28 = arith.constant 0.000000e+00 : f32
      %77 = arith.subf %cst_28, %76 : f32
      %78 = vector.broadcast %77 : f32 to vector<1x1x8x128xf32>
      %c0_29 = arith.constant 0 : index
      %c0_30 = arith.constant 0 : index
      %c0_31 = arith.constant 0 : index
      %c0_32 = arith.constant 0 : index
      %79 = vector.load %arg8[%c0_29, %c0_30, %c0_31, %c0_32] : memref<1x1x8x128xf32, #tpu.memory_space<vmem>>, vector<1x1x8x128xf32>
      tpu.vector_store %arg8[%c0_29, %c0_30, %c0_31, %c0_32], %78 {strides = array<i32>} : memref<1x1x8x128xf32, #tpu.memory_space<vmem>>, vector<1x1x8x128xf32>,
    } else {
    }
    return
  }
  func.func @transform_0(%arg0: i32, %arg1: i32, %arg2: i32) -> (i32, i32, i32) {
    %c0_i32 = arith.constant 0 : i32
    %c0_i32_0 = arith.constant 0 : i32
    %c0_i32_1 = arith.constant 0 : i32
    return %arg1, %c0_i32, %c0_i32_0 : i32, i32, i32
  }
  func.func @transform_1(%arg0: i32, %arg1: i32, %arg2: i32) -> (i32, i32, i32) {
    %c0_i32 = arith.constant 0 : i32
    %c0_i32_0 = arith.constant 0 : i32
    %c0_i32_1 = arith.constant 0 : i32
    return %arg1, %c0_i32, %c0_i32_0 : i32, i32, i32
  }
  func.func @transform_2(%arg0: i32, %arg1: i32, %arg2: i32) -> (i32, i32, i32) {
    %c0_i32 = arith.constant 0 : i32
    %c0_i32_0 = arith.constant 0 : i32
    %c0_i32_1 = arith.constant 0 : i32
    return %arg1, %c0_i32, %c0_i32_0 : i32, i32, i32
  }
  func.func @transform_3(%arg0: i32, %arg1: i32, %arg2: i32) -> (i32, i32, i32) {
    %c0_i32 = arith.constant 0 : i32
    %c0_i32_0 = arith.constant 0 : i32
    %c0_i32_1 = arith.constant 0 : i32
    return %arg1, %c0_i32, %c0_i32_0 : i32, i32, i32
  }
  func.func @transform_4(%arg0: i32, %arg1: i32, %arg2: i32) -> (i32, i32, i32) {
    %c1_i32 = arith.constant 1 : i32
    %0 = arith.muli %arg0, %c1_i32 : i32
    %1 = arith.addi %0, %arg2 : i32
    %c0_i32 = arith.constant 0 : i32
    %c0_i32_0 = arith.constant 0 : i32
    return %arg1, %1, %c0_i32 : i32, i32, i32
  }
  func.func @transform_5(%arg0: i32, %arg1: i32, %arg2: i32) -> (i32, i32, i32, i32) {
    %c0_i32 = arith.constant 0 : i32
    %c0_i32_0 = arith.constant 0 : i32
    %c0_i32_1 = arith.constant 0 : i32
    return %arg0, %arg1, %c0_i32, %c0_i32_0 : i32, i32, i32, i32
  }
}

</mosaic_0001>

<llo_original>
// kernel: tpu_custom_call.1
$region0: #{tpu_custom_call.1}
  #allocation0 [shape = 'u32[]', space=smem, size = 0x4, offset = 0x4, fixed_abs, tag = 'smem constant byte address 0x4 - core index']
  #allocation1 [shape = 'u32[144,128]{1,0:T(1,128)}', space=vmem, size = 0x12000, scoped, tag = 'internal scratch']
  #allocation2 [shape = 'f32[1,16]{1,0:T(1,128)}', space=vmem, size = 0x200, scoped, tag = 'scratch operand']
  %s0 = inlined_call_operand.vmem [shape: f32[2,16,3], index: 0, kind: input, shape index: {}]
  %s1 = inlined_call_operand.vmem [shape: f32[2,3,16], index: 1, kind: input, shape index: {}]
  %s2 = inlined_call_operand.vmem [shape: f32[2,16,1], index: 2, kind: input, shape index: {}]
  %s3 = inlined_call_operand.vmem [shape: f32[2,1,16], index: 3, kind: input, shape index: {}]
  %s4 = inlined_call_operand.vmem [shape: f32[2,16,16], index: 4, kind: input, shape index: {}]
  %s5 = inlined_call_operand.hbm [shape: f32[2,2,8,128], index: 5, kind: output, shape index: {}]
  %s6 = sld [smem:[#allocation0]]
  $region61: #{tpu_custom_call.1} parent=0
    _
  %s8 = ssub.s32 1, %s6
  %s9 = scalar_select 0, %s8, %s6
  $region1: #{tpu_custom_call.1} parent=0
    #allocation3 [shape = 'u8[8192]{0}', space=vmem, size = 0x2000, scoped, tag = 'output window, operand 0']
    #allocation4 [shape = 's32[2]{0}', space=sflag, size = 0x8, scoped, tag = 'scoped memory for tpu_custom_call.1']
    %10 = vsyncpa [#allocation4], 0
    %s11 = scalar_lea.sflag [#allocation4], 1
    %12 = vsyncpa %s11, 0
    loop: start=0, step=1, limit=6
    $region2: #{tpu_custom_call.1} parent=1 // loop_pre_header
      _
    $region3: #{tpu_custom_call.1} parent=1 // loop_header
      %s14 = sphi 0, %s18
      %p15 = scmp.ge.s32.totalorder %s14, 6
      %s21 = sphi 0, %s40
      %s22 = sphi 0, %s36
      %s23 = sphi 0, %s32
      %s24 = sphi 0, %s21
      %s25 = sphi 0, %s22
      %s26 = sphi 0, %s23
      %s27 = sphi 0, %s24
      %s28 = sphi 0, %s25
      %s29 = sphi 0, %s26
      %s43 = sphi 0, %s45
      %s46 = sphi 0, %s43
      %s47 = sphi 0, %s46
      %s63 = sphi 0, %s47
      %s69 = sphi 0, %s71
      %s72 = sphi 0, %s69
      %s73 = sphi 0, %s72
      %s89 = sphi 0, %s73
      %s95 = sphi 0, %s97
      %s98 = sphi 0, %s95
      %s99 = sphi 0, %s98
      %s115 = sphi 0, %s99
      %s121 = sphi 0, %s123
      %s124 = sphi 0, %s121
      %s125 = sphi 0, %s124
      %s141 = sphi 0, %s125
      %s151 = sphi 0, %s153
      %s154 = sphi 0, %s151
      %s155 = sphi 0, %s154
      %s171 = sphi 0, %s155
      %s179 = sphi 0, %s181
      %s182 = sphi 0, %s179
      %s183 = sphi 0, %s182
      %s199 = sphi 0, %s183
    $region4: #{tpu_custom_call.1} parent=1 // loop_header_branch
      %17 = sbr.rel (%p15) target = $region8
    $region5: #{tpu_custom_call.1} parent=1 // loop_body
      %s19 = ssub.s32 %s14, 1
      %s20 = ssub.s32 %s14, 2
      %s30 = sadd.s32 1, %s23
      %p31 = scmp.ge.s32.totalorder %s30, 1
      %s32 = scalar_select %p31, 0, %s30
      %s33 = sadd.s32 1, %s22
      %s34 = scalar_select %p31, %s33, %s22
      %p35 = scmp.ge.s32.totalorder %s34, 2
      %s36 = scalar_select %p35, 0, %s34
      %s37 = sadd.s32 1, %s21
      %s38 = scalar_select %p35, %s37, %s21
      %p39 = scmp.ge.s32.totalorder %s38, 2
      %s40 = scalar_select %p39, 0, %s38
      %s41 = ssub.s32 %s22, %s36
      %p42 = scmp.eq.s32.totalorder %s41, 0
      %s44 = sadd.s32 %s43, 1
      %s45 = scalar_select %p42, %s43, %s44
      %p48 = pneg %p42
      %p49 = scmp.eq.s32.totalorder %s14, 3
      %p50 = por %p48, %p49
      %p51 = scmp.ne.s32.totalorder %s43, %s46
      %p52 = scmp.eq.s32.totalorder %s14, 0
      %p53 = por %p51, %p52
      %p54 = scmp.ne.s32.totalorder %s43, %s46
      %p55 = scmp.eq.s32.totalorder %s19, 3
      %p56 = por %p54, %p55
      %p57 = scmp.ne.s32.totalorder %s46, %s47
      %p58 = scmp.eq.s32.totalorder %s19, 0
      %p59 = por %p57, %p58
      %p60 = scmp.ne.s32.totalorder %s46, %s47
      %p61 = scmp.eq.s32.totalorder %s20, 3
      %p62 = por %p60, %p61
      %p64 = scmp.ne.s32.totalorder %s47, %s63
      %p65 = scmp.eq.s32.totalorder %s20, 0
      %p66 = por %p64, %p65
      %s67 = ssub.s32 %s22, %s36
      %p68 = scmp.eq.s32.totalorder %s67, 0
      %s70 = sadd.s32 %s69, 1
      %s71 = scalar_select %p68, %s69, %s70
      %p74 = pneg %p68
      %p75 = scmp.eq.s32.totalorder %s14, 3
      %p76 = por %p74, %p75
      %p77 = scmp.ne.s32.totalorder %s69, %s72
      %p78 = scmp.eq.s32.totalorder %s14, 0
      %p79 = por %p77, %p78
      %p80 = scmp.ne.s32.totalorder %s69, %s72
      %p81 = scmp.eq.s32.totalorder %s19, 3
      %p82 = por %p80, %p81
      %p83 = scmp.ne.s32.totalorder %s72, %s73
      %p84 = scmp.eq.s32.totalorder %s19, 0
      %p85 = por %p83, %p84
      %p86 = scmp.ne.s32.totalorder %s72, %s73
      %p87 = scmp.eq.s32.totalorder %s20, 3
      %p88 = por %p86, %p87
      %p90 = scmp.ne.s32.totalorder %s73, %s89
      %p91 = scmp.eq.s32.totalorder %s20, 0
      %p92 = por %p90, %p91
      %s93 = ssub.s32 %s22, %s36
      %p94 = scmp.eq.s32.totalorder %s93, 0
      %s96 = sadd.s32 %s95, 1
      %s97 = scalar_select %p94, %s95, %s96
      %p100 = pneg %p94
      %p101 = scmp.eq.s32.totalorder %s14, 3
      %p102 = por %p100, %p101
      %p103 = scmp.ne.s32.totalorder %s95, %s98
      %p104 = scmp.eq.s32.totalorder %s14, 0
      %p105 = por %p103, %p104
      %p106 = scmp.ne.s32.totalorder %s95, %s98
      %p107 = scmp.eq.s32.totalorder %s19, 3
      %p108 = por %p106, %p107
      %p109 = scmp.ne.s32.totalorder %s98, %s99
      %p110 = scmp.eq.s32.totalorder %s19, 0
      %p111 = por %p109, %p110
      %p112 = scmp.ne.s32.totalorder %s98, %s99
      %p113 = scmp.eq.s32.totalorder %s20, 3
      %p114 = por %p112, %p113
      %p116 = scmp.ne.s32.totalorder %s99, %s115
      %p117 = scmp.eq.s32.totalorder %s20, 0
      %p118 = por %p116, %p117
      %s119 = ssub.s32 %s22, %s36
      %p120 = scmp.eq.s32.totalorder %s119, 0
      %s122 = sadd.s32 %s121, 1
      %s123 = scalar_select %p120, %s121, %s122
      %p126 = pneg %p120
      %p127 = scmp.eq.s32.totalorder %s14, 3
      %p128 = por %p126, %p127
      %p129 = scmp.ne.s32.totalorder %s121, %s124
      %p130 = scmp.eq.s32.totalorder %s14, 0
      %p131 = por %p129, %p130
      %p132 = scmp.ne.s32.totalorder %s121, %s124
      %p133 = scmp.eq.s32.totalorder %s19, 3
      %p134 = por %p132, %p133
      %p135 = scmp.ne.s32.totalorder %s124, %s125
      %p136 = scmp.eq.s32.totalorder %s19, 0
      %p137 = por %p135, %p136
      %p138 = scmp.ne.s32.totalorder %s124, %s125
      %p139 = scmp.eq.s32.totalorder %s20, 3
      %p140 = por %p138, %p139
      %p142 = scmp.ne.s32.totalorder %s125, %s141
      %p143 = scmp.eq.s32.totalorder %s20, 0
      %p144 = por %p142, %p143
      %s145 = sadd.s32 %s21, %s23
      %s146 = sadd.s32 %s40, %s32
      %s147 = ssub.s32 %s22, %s36
      %s148 = ssub.s32 %s145, %s146
      %s149 = sor.u32 %s147, %s148
      %p150 = scmp.eq.s32.totalorder %s149, 0
      %s152 = sadd.s32 %s151, 1
      %s153 = scalar_select %p150, %s151, %s152
      %p156 = pneg %p150
      %p157 = scmp.eq.s32.totalorder %s14, 3
      %p158 = por %p156, %p157
      %p159 = scmp.ne.s32.totalorder %s151, %s154
      %p160 = scmp.eq.s32.totalorder %s14, 0
      %p161 = por %p159, %p160
      %p162 = scmp.ne.s32.totalorder %s151, %s154
      %p163 = scmp.eq.s32.totalorder %s19, 3
      %p164 = por %p162, %p163
      %p165 = scmp.ne.s32.totalorder %s154, %s155
      %p166 = scmp.eq.s32.totalorder %s19, 0
      %p167 = por %p165, %p166
      %p168 = scmp.ne.s32.totalorder %s154, %s155
      %p169 = scmp.eq.s32.totalorder %s20, 3
      %p170 = por %p168, %p169
      %p172 = scmp.ne.s32.totalorder %s155, %s171
      %p173 = scmp.eq.s32.totalorder %s20, 0
      %p174 = por %p172, %p173
      %s175 = ssub.s32 %s21, %s40
      %s176 = ssub.s32 %s22, %s36
      %s177 = sor.u32 %s175, %s176
      %p178 = scmp.eq.s32.totalorder %s177, 0
      %s180 = sadd.s32 %s179, 1
      %s181 = scalar_select %p178, %s179, %s180
      %p184 = pneg %p178
      %p185 = scmp.eq.s32.totalorder %s14, 3
      %p186 = por %p184, %p185
      %p187 = scmp.ne.s32.totalorder %s179, %s182
      %p188 = scmp.eq.s32.totalorder %s14, 0
      %p189 = por %p187, %p188
      %p190 = scmp.ne.s32.totalorder %s179, %s182
      %p191 = scmp.eq.s32.totalorder %s19, 3
      %p192 = por %p190, %p191
      %p193 = scmp.ne.s32.totalorder %s182, %s183
      %p194 = scmp.eq.s32.totalorder %s19, 0
      %p195 = por %p193, %p194
      %p196 = scmp.ne.s32.totalorder %s182, %s183
      %p197 = scmp.eq.s32.totalorder %s20, 3
      %p198 = por %p196, %p197
      %p200 = scmp.ne.s32.totalorder %s183, %s199
      %p201 = scmp.eq.s32.totalorder %s20, 0
      %p202 = por %p200, %p201
      %p203 = scmp.le.s32.totalorder 1, %s14
      %p204 = scmp.lt.s32.totalorder %s14, 5
      %p205 = pnand %p203, %p204
      %p206 = pneg %p205
      // Predicated region
      $region9: #{tpu_custom_call.1} parent=5 // pred_check
        _
      $region10: #{tpu_custom_call.1} parent=5 // pred_check_branch
        %208 = sbr.rel (%p205) target = $region12
      $region11: #{tpu_custom_call.1} parent=5 // pred_region
        %s209 = ssub.s32 %s14, 1
      $region12: #{tpu_custom_call.1} parent=5 // pred_fallthru
        _
      %p210 = scmp.lt.s32.totalorder %s14, 4
      // Predicated region
      $region13: #{tpu_custom_call.1} parent=5 // pred_check
        %p211 = pneg %p210
      $region14: #{tpu_custom_call.1} parent=5 // pred_check_branch
        %213 = sbr.rel (%p211) target = $region16
      $region15: #{tpu_custom_call.1} parent=5 // pred_region
        // Predicated region
        $region17: #{tpu_custom_call.1} parent=15 // pred_check
          %p214 = pneg %p53
        $region18: #{tpu_custom_call.1} parent=15 // pred_check_branch
          %216 = sbr.rel (%p214) target = $region20
        $region19: #{tpu_custom_call.1} parent=15 // pred_region
          %p217 = scmp.lt.s32.totalorder %s22, 1
          %s218 = scalar_select %p217, %s22, 1
          %s219 = smul.addr %s218, 2
          %s220 = smul.addr %s219, 8
          %s221 = scalar_lea.vmem %s0, %s220
        $region20: #{tpu_custom_call.1} parent=15 // pred_fallthru
          _
        // Predicated region
        $region21: #{tpu_custom_call.1} parent=15 // pred_check
          %p222 = pneg %p79
        $region22: #{tpu_custom_call.1} parent=15 // pred_check_branch
          %224 = sbr.rel (%p222) target = $region24
        $region23: #{tpu_custom_call.1} parent=15 // pred_region
          %p225 = scmp.lt.s32.totalorder %s22, 1
          %s226 = scalar_select %p225, %s22, 1
          %s227 = smul.addr %s226, 4
          %s228 = scalar_lea.vmem %s1, %s227
        $region24: #{tpu_custom_call.1} parent=15 // pred_fallthru
          _
        // Predicated region
        $region25: #{tpu_custom_call.1} parent=15 // pred_check
          %p229 = pneg %p105
        $region26: #{tpu_custom_call.1} parent=15 // pred_check_branch
          %231 = sbr.rel (%p229) target = $region28
        $region27: #{tpu_custom_call.1} parent=15 // pred_region
          %p232 = scmp.lt.s32.totalorder %s22, 1
          %s233 = scalar_select %p232, %s22, 1
          %s234 = smul.addr %s233, 2
          %s235 = smul.addr %s234, 8
          %s236 = scalar_lea.vmem %s2, %s235
        $region28: #{tpu_custom_call.1} parent=15 // pred_fallthru
          _
        // Predicated region
        $region29: #{tpu_custom_call.1} parent=15 // pred_check
          %p237 = pneg %p131
        $region30: #{tpu_custom_call.1} parent=15 // pred_check_branch
          %239 = sbr.rel (%p237) target = $region32
        $region31: #{tpu_custom_call.1} parent=15 // pred_region
          %p240 = scmp.lt.s32.totalorder %s22, 1
          %s241 = scalar_select %p240, %s22, 1
          %s242 = scalar_lea.vmem %s3, %s241
        $region32: #{tpu_custom_call.1} parent=15 // pred_fallthru
          _
        // Predicated region
        $region33: #{tpu_custom_call.1} parent=15 // pred_check
          %p243 = pneg %p161
        $region34: #{tpu_custom_call.1} parent=15 // pred_check_branch
          %245 = sbr.rel (%p243) target = $region36
        $region35: #{tpu_custom_call.1} parent=15 // pred_region
          %s246 = sadd.s32 %s21, %s23
          %p247 = scmp.lt.s32.totalorder %s22, 1
          %s248 = scalar_select %p247, %s22, 1
          %p249 = scmp.lt.s32.totalorder %s246, 1
          %s250 = scalar_select %p249, %s246, 1
          %s251 = smul.addr %s248, 2
          %s252 = sadd.s32 %s250, %s251
          %s253 = smul.addr %s252, 8
          %s254 = scalar_lea.vmem %s4, %s253
          %s255 = sadd.s32 %s21, %s23
        $region36: #{tpu_custom_call.1} parent=15 // pred_fallthru
          _
      $region16: #{tpu_custom_call.1} parent=5 // pred_fallthru
        _
      %p256 = scmp.le.s32.totalorder 1, %s14
      %p257 = scmp.lt.s32.totalorder %s14, 5
      %p258 = pnand %p256, %p257
      %p259 = pneg %p258
      // Predicated region
      $region37: #{tpu_custom_call.1} parent=5 // pred_check
        _
      $region38: #{tpu_custom_call.1} parent=5 // pred_check_branch
        %261 = sbr.rel (%p258) target = $region40
      $region39: #{tpu_custom_call.1} parent=5 // pred_region
        %s262 = ssub.s32 %s14, 1
        %p263 = scmp.lt.s32.totalorder %s25, 1
        %s264 = scalar_select %p263, %s25, 1
        %s265 = smul.addr %s264, 2
        %s266 = smul.addr %s265, 8
        %s267 = scalar_lea.vmem %s0, %s266
        %p268 = pneg %p59
        %p269 = pneg %p56
        %p270 = scmp.lt.s32.totalorder %s25, 1
        %s271 = scalar_select %p270, %s25, 1
        %s272 = smul.addr %s271, 4
        %s273 = scalar_lea.vmem %s1, %s272
        %p274 = pneg %p85
        %p275 = pneg %p82
        %p276 = scmp.lt.s32.totalorder %s25, 1
        %s277 = scalar_select %p276, %s25, 1
        %s278 = smul.addr %s277, 2
        %s279 = smul.addr %s278, 8
        %s280 = scalar_lea.vmem %s2, %s279
        %p281 = pneg %p111
        %p282 = pneg %p108
        %p283 = scmp.lt.s32.totalorder %s25, 1
        %s284 = scalar_select %p283, %s25, 1
        %s285 = scalar_lea.vmem %s3, %s284
        %p286 = pneg %p137
        %p287 = pneg %p134
        %s288 = sadd.s32 %s24, %s26
        %p289 = scmp.lt.s32.totalorder %s25, 1
        %s290 = scalar_select %p289, %s25, 1
        %p291 = scmp.lt.s32.totalorder %s288, 1
        %s292 = scalar_select %p291, %s288, 1
        %s293 = smul.addr %s290, 2
        %s294 = sadd.s32 %s292, %s293
        %s295 = smul.addr %s294, 8
        %s296 = scalar_lea.vmem %s4, %s295
        %p297 = pneg %p167
        %p298 = pneg %p164
        %p299 = pneg %p195
        %p300 = pneg %p192
        %s301 = sand.u32 %s182, 1
        %s302 = scalar_lea.sflag [#allocation4], %s301
        %s303 = sand.u32 %s182, 1
        %s304 = smul.addr %s303, 8
        %s305 = scalar_lea.vmem [#allocation3], %s304
        %p306 = scmp.lt.s32.totalorder %s25, 1
        %s307 = scalar_select %p306, %s25, 1
        %s308 = smul.addr %s307, 2
        %s309 = smul.addr %s308, 8
        %s310 = scalar_lea.vmem %s0, %s309
        %p311 = scmp.lt.s32.totalorder %s25, 1
        %s312 = scalar_select %p311, %s25, 1
        %s313 = smul.addr %s312, 4
        %s314 = scalar_lea.vmem %s1, %s313
        %p315 = scmp.lt.s32.totalorder %s25, 1
        %s316 = scalar_select %p315, %s25, 1
        %s317 = smul.addr %s316, 2
        %s318 = smul.addr %s317, 8
        %s319 = scalar_lea.vmem %s2, %s318
        %p320 = scmp.lt.s32.totalorder %s25, 1
        %s321 = scalar_select %p320, %s25, 1
        %s322 = scalar_lea.vmem %s3, %s321
        %s323 = sadd.s32 %s24, %s26
        %p324 = scmp.lt.s32.totalorder %s25, 1
        %s325 = scalar_select %p324, %s25, 1
        %p326 = scmp.lt.s32.totalorder %s323, 1
        %s327 = scalar_select %p326, %s323, 1
        %s328 = smul.addr %s325, 2
        %s329 = sadd.s32 %s327, %s328
        %s330 = smul.addr %s329, 8
        %s331 = scalar_lea.vmem %s4, %s330
        %s332 = sadd.s32 %s24, %s26
        %p333 = scmp.eq.s32.totalorder %s26, 0
        // Predicated region
        $region41: #{tpu_custom_call.1} parent=39 // pred_check
          %p334 = pneg %p333
        $region42: #{tpu_custom_call.1} parent=39 // pred_check_branch
          %336 = sbr.rel (%p334) target = $region44
        $region43: #{tpu_custom_call.1} parent=39 // pred_region
          %vm337 = vcmask 122880
          %338 = vst.msk [vmem:[#allocation2] sm:$0x1] %vm337, 0.0
        $region44: #{tpu_custom_call.1} parent=39 // pred_fallthru
          _
        %s339 = sadd.s32 %s24, %s26
        %s340 = smul.u32 %s339, 8
        %s341 = scalar_lea.vmem %s310, %s340
        %v342 = vld [vmem:[%s341] sm:$0xff]
        %v343 = vld [vmem:[%s314] sm:$0x7]
        %s344 = scalar_lea.vmem %s319, %s340
        %v345 = vld [vmem:[%s344] sm:$0xff]
        %vm346 = vcmp.gt.f32.partialorder %v345, 0.5
        %v347 = vld [vmem:[%s322] sm:$0x1]
        %vm348 = vcmp.gt.f32.partialorder %v347, 0.5
        %v349 = vld [vmem:[%s331] sm:$0xff]
        %351 = vset.pattern.permute.xlu0 0
        %352 = vperm.xlu0 %351, %v342
        %v353 = vpop.permute.xlu0 %352
        %v355 = vlaneseq
        %v356 = vshrl.u32 %v355, 7
        %v357 = vsub.s32 0, %v356
        %v358 = vrot.slane %v343, %v357
        %v359 = vsub.f32 %v353, %v358
        %v360 = vmul.f32 %v359, %v359
        %361 = vset.pattern.permute.xlu0 1
        %362 = vperm.xlu0 %361, %v342
        %v363 = vpop.permute.xlu0 %362
        %v365 = vlaneseq
        %v366 = vshrl.u32 %v365, 7
        %v367 = vsub.s32 1, %v366
        %v368 = vrot.slane %v343, %v367
        %v369 = vsub.f32 %v363, %v368
        %v370 = vmul.f32 %v369, %v369
        %v371 = vadd.f32 %v360, %v370
        %372 = vset.pattern.permute.xlu0 2
        %373 = vperm.xlu0 %372, %v342
        %v374 = vpop.permute.xlu0 %373
        %v376 = vlaneseq
        %v377 = vshrl.u32 %v376, 7
        %v378 = vsub.s32 2, %v377
        %v379 = vrot.slane %v343, %v378
        %v380 = vsub.f32 %v374, %v379
        %v381 = vmul.f32 %v380, %v380
        %v382 = vadd.f32 %v371, %v381
        %vm383 = vcmp.le.f32.partialorder %v382, 64.0
        %v384 = vsub.f32 1.0, %v349
        %v385 = vsel %vm383, %v349, %v384
        %v386 = vlog2.pop %v385
        %v387 = vmul.f32 %v386, 0.6931472
        %v388 = vmax.f32 %v387, -100.0
        %v389 = vlaneseq
        %v390 = vshrl.u32 %v389, 7
        %v391 = vlaneseq
        %v392 = vand.u32 %v391, 127
        %v393 = vstv %s340
        %v394 = vsub.s32 %v392, %v393
        %vm395 = vcmp.ne.s32.totalorder %v390, %v394
        %v396 = vsel %vm346, 1, 0
        %397 = vset.pattern.permute.xlu0 0
        %398 = vperm.xlu0 %397, %v396
        %v399 = vpop.permute.xlu0 %398
        %vm400 = vcmp.eq.s32.totalorder %v399, 1
        %vm401 = vmand %vm395, %vm400
        %v402 = vsel %vm348, 1, 0
        %v403 = vlaneseq
        %v404 = vshrl.u32 %v403, 7
        %v405 = vsub.s32 0, %v404
        %v406 = vrot.slane %v402, %v405
        %vm407 = vcmp.eq.s32.totalorder %v406, 1
        %vm408 = vmand %vm401, %vm407
        %v409 = vld [vmem:[#allocation2] sm:$0x1]
        %v410 = vsel %vm408, %v388, 0.0
        %vm411 = vcmask 130048
        %v412 = vsel %vm411, %v410, 0.0
        %v413 = vrot.slane %v412, 4
        %v414 = vadd.f32 %v412, %v413
        %v415 = vrot.slane %v414, 2
        %v416 = vadd.f32 %v414, %v415
        %v417 = vrot.slane %v416, 1
        %v418 = vadd.f32 %v416, %v417
        %v419 = vadd.f32 %v409, %v418
        %vm420 = vcmask 122880
        %421 = vst.msk [vmem:[#allocation2] sm:$0x1] %vm420, %v419
        // Predicated region
        $region45: #{tpu_custom_call.1} parent=39 // pred_check
          %p422 = pneg %p333
        $region46: #{tpu_custom_call.1} parent=39 // pred_check_branch
          %424 = sbr.rel (%p422) target = $region48
        $region47: #{tpu_custom_call.1} parent=39 // pred_region
          %v425 = vld [vmem:[#allocation2] sm:$0x1]
          %v426 = vsel %vm420, %v425, 0.0
          %427 = vadd.xlane.f32.xlu0 %v426
          %v428 = vpop.xlane.xlu0 %427
          %v429 = vrot.slane %v428, 4
          %v430 = vadd.f32 %v428, %v429
          %v431 = vrot.slane %v430, 2
          %v432 = vadd.f32 %v430, %v431
          %v433 = vrot.slane %v432, 1
          %v434 = vadd.f32 %v432, %v433
          %s435 = vtos %v434
          %s436 = ssub.f32 0.0, %s435
          %v437 = vstv %s436
          %438 = vst [vmem:[%s305] sm:$0xff] %v437
        $region48: #{tpu_custom_call.1} parent=39 // pred_fallthru
          _
        %s439 = sand.u32 %s182, 1
        %s440 = scalar_lea.sflag [#allocation4], %s439
        %s441 = sand.u32 %s182, 1
        %s442 = smul.addr %s441, 8
        %s443 = scalar_lea.vmem [#allocation3], %s442
        // Predicated region
        $region49: #{tpu_custom_call.1} parent=39 // pred_check
          %p444 = pneg %p192
        $region50: #{tpu_custom_call.1} parent=39 // pred_check_branch
          %446 = sbr.rel (%p444) target = $region52
        $region51: #{tpu_custom_call.1} parent=39 // pred_region
          %s448 = ssub.s32 128, 128
          %449 = vsyncadd %s440, %s448
          %s450 = smul.addr %s24, 2
          %s451 = sadd.s32 %s25, %s450
          %s452 = smul.addr %s451, 128
          %s453 = scalar_lea.hbm %s5, %s452
          %s455 = sshll.u32 %s443, 4
          %s456 = int_to_ptr.vmem [resolvable:$true] %s455
          %458 = dma.vmem_to_hbm [thread:$0]  %s456, 128, %s453, %s440
        $region52: #{tpu_custom_call.1} parent=39 // pred_fallthru
          _
      $region40: #{tpu_custom_call.1} parent=5 // pred_fallthru
        _
      %p459 = scmp.le.s32.totalorder 2, %s14
      // Predicated region
      $region53: #{tpu_custom_call.1} parent=5 // pred_check
        %p460 = pneg %p459
      $region54: #{tpu_custom_call.1} parent=5 // pred_check_branch
        %462 = sbr.rel (%p460) target = $region56
      $region55: #{tpu_custom_call.1} parent=5 // pred_region
        %s463 = ssub.s32 %s14, 2
        // Predicated region
        $region57: #{tpu_custom_call.1} parent=55 // pred_check
          %p464 = pneg %p198
        $region58: #{tpu_custom_call.1} parent=55 // pred_check_branch
          %466 = sbr.rel (%p464) target = $region60
        $region59: #{tpu_custom_call.1} parent=55 // pred_region
          %s467 = sand.u32 %s183, 1
          %s468 = scalar_lea.sflag [#allocation4], %s467
          %s469 = sand.u32 %s183, 1
          %s470 = smul.addr %s469, 8
          %s471 = scalar_lea.vmem [#allocation3], %s470
          %472 = dma.done %s468, 128
        $region60: #{tpu_custom_call.1} parent=55 // pred_fallthru
          _
      $region56: #{tpu_custom_call.1} parent=5 // pred_fallthru
        _
    $region6: #{tpu_custom_call.1} parent=1 // loop_footer
      %s18 = sadd.s32 1, %s14
    $region7: #{tpu_custom_call.1} parent=1 // loop_footer_branch
      %13 = sbr.rel target = $region3
    $region8: #{tpu_custom_call.1} parent=1 // loop_exit
      _
    %473 = vsyncpa [#allocation4], 1
    %s474 = scalar_lea.sflag [#allocation4], 1
    %475 = vsyncpa %s474, 1

</llo_original>
